<compile_context>
chip_gen: v7x
topology: tpu7x:2x2x1
jax: 0.10.0
libtpu: 0.0.40
codegen_flags: <defaults>
</compile_context>

<pallas_src>
import math

import jax
import jax.numpy as jnp
from jax.experimental import pallas as pl
from jax.experimental.pallas import tpu as pltpu

_LANE = 128


def _round_up(n: int, m: int) -> int:
    return ((n + m - 1) // m) * m


def _make_encoder_kernel(num_mid: int, conditional: bool, mid_packed: bool,
                         bias_widths):
    """Fused kernel: (x[, c]) -> [Linear+ReLU]* -> fused means|log_var head."""

    def kernel(*refs):
        idx = 0
        x_ref = refs[idx]; idx += 1
        c_ref = None
        if conditional:
            c_ref = refs[idx]; idx += 1
        w0x_ref = refs[idx]; idx += 1
        w0c_ref = None
        if conditional:
            w0c_ref = refs[idx]; idx += 1
        if num_mid > 0 and mid_packed:
            wmid_ref = refs[idx]; idx += 1
            mid_w_refs = None
        else:
            mid_w_refs = [refs[idx + j] for j in range(num_mid)]
            idx += num_mid
        wh_ref = refs[idx]; idx += 1
        ball_ref = refs[idx]; idx += 1
        out_ref = refs[idx]

        # All biases live in one small f32 slab; slice per layer (static).
        biases = ball_ref[...]

        def bias(j):
            return biases[j:j + 1, :bias_widths[j]]

        # Layer 0: torch.cat fused via split weights; bf16 MXU, f32 accum.
        h = jnp.dot(x_ref[...].astype(jnp.bfloat16), w0x_ref[...],
                    preferred_element_type=jnp.float32)
        if conditional:
            h = h + jnp.dot(c_ref[...].astype(jnp.bfloat16), w0c_ref[...],
                            preferred_element_type=jnp.float32)
        # Bias + ReLU in f32, then end the f32 live range: carry h in bf16
        # (identical values to casting inside the next dot, less vreg traffic).
        h = jnp.maximum(h + bias(0), 0.0).astype(jnp.bfloat16)

        # Remaining hidden Linear+ReLU layers (widths padded to 128 lanes).
        for j in range(num_mid):
            w = wmid_ref[j] if mid_packed else mid_w_refs[j][...]
            h = jnp.dot(h, w, preferred_element_type=jnp.float32)
            h = jnp.maximum(h + bias(1 + j), 0.0).astype(jnp.bfloat16)

        # Fused means|log_var head on a 128-lane slab; store only the 2L
        # useful lanes so the HBM writeback is not 4x padded.
        out = jnp.dot(h, wh_ref[...], preferred_element_type=jnp.float32)
        out = out + bias(1 + num_mid)
        out_ref[...] = out[:, :out_ref.shape[1]].astype(out_ref.dtype)

    return kernel


class Encoder:
    """JAX/Pallas port of dexlearn.network.final_layers.cvae.cvae.Encoder."""

    def __init__(self, layer_sizes, latent_size, conditional, condition_size,
                 *, key=None):
        layer_sizes = list(layer_sizes)
        self.conditional = bool(conditional)
        self.in_size = layer_sizes[0]                     # raw x feature width
        self.condition_size = condition_size if self.conditional else 0
        self.latent_size = latent_size
        if self.conditional:
            layer_sizes[0] += condition_size

        if key is None:
            key = jax.random.PRNGKey(0)

        # PyTorch-style init: uniform(-1/sqrt(fan_in), +1/sqrt(fan_in)).
        def init_linear(k, fan_in, fan_out):
            kw, kb = jax.random.split(k)
            bound = 1.0 / math.sqrt(fan_in)
            w = jax.random.uniform(kw, (fan_in, fan_out), jnp.float32,
                                   minval=-bound, maxval=bound)
            b = jax.random.uniform(kb, (fan_out,), jnp.float32,
                                   minval=-bound, maxval=bound)
            return w, b

        keys = jax.random.split(key, len(layer_sizes) + 1)
        # Logical (un-padded, f32, transposed-vs-torch) parameters.
        self.mlp_params = []
        for i, (fi, fo) in enumerate(zip(layer_sizes[:-1], layer_sizes[1:])):
            self.mlp_params.append(init_linear(keys[i], fi, fo))
        self.wm, self.bm = init_linear(keys[-2], layer_sizes[-1], latent_size)
        self.wv, self.bv = init_linear(keys[-1], layer_sizes[-1], latent_size)

        self._build_kernel_params()

    # -- one-time padding / bf16 cast / packing of kernel-side parameters ----
    def _build_kernel_params(self):
        def pad2(a, rows, cols):
            return jnp.pad(a, ((0, rows - a.shape[0]), (0, cols - a.shape[1])))

        def pad1(a, cols):
            return jnp.pad(a, (0, cols - a.shape[0]))

        # Layer 0: split into x / c halves, pad the output dim to 128 lanes.
        w0, b0 = self.mlp_params[0]
        h0p = _round_up(w0.shape[1], _LANE)
        w0x = w0[:self.in_size]
        self.k_w0x = pad2(w0x, w0x.shape[0], h0p).astype(jnp.bfloat16)
        if self.conditional:
            w0c = w0[self.in_size:]
            self.k_w0c = pad2(w0c, w0c.shape[0], h0p).astype(jnp.bfloat16)
        else:
            self.k_w0c = None

        # Remaining hidden layers: K padded to previous padded N, N to 128.
        mid_ws, mid_bs, mid_widths = [], [], []
        prev_p = h0p
        for (w, b) in self.mlp_params[1:]:
            fop = _round_up(w.shape[1], _LANE)
            mid_ws.append(pad2(w, prev_p, fop).astype(jnp.bfloat16))
            mid_bs.append(b)
            mid_widths.append(fop)
            prev_p = fop
        self.num_mid = len(mid_ws)

        # Pack uniform mid-layer weights into one (num_mid, Kp, Np) operand
        # (one DMA descriptor / BlockSpec instead of num_mid).
        self.mid_packed = (self.num_mid > 0
                           and len({w.shape for w in mid_ws}) == 1)
        if self.mid_packed:
            self.k_wmid = jnp.stack(mid_ws)
            self.k_mid_ws = None
        else:
            self.k_wmid = None
            self.k_mid_ws = mid_ws

        # Fused heads: [means | log_var | zero-pad] into one 128-lane slab.
        L = self.latent_size
        wh = jnp.concatenate([self.wm, self.wv], axis=1)   # (hidden, 2L)
        bh = jnp.concatenate([self.bm, self.bv], axis=0)   # (2L,)
        self.out_pad = _round_up(2 * L, _LANE)
        self.k_wh = pad2(wh, prev_p, self.out_pad).astype(jnp.bfloat16)
        self.hidden_pad = prev_p

        # All biases packed into one resident f32 operand, f32 kept for the
        # bias+ReLU epilogues (safe on v5e's f32-only VPU).
        self.bias_widths = [h0p] + mid_widths + [self.out_pad]
        max_w = max(self.bias_widths)
        rows = ([pad1(b0, max_w)]
                + [pad1(b, max_w) for b in mid_bs]
                + [pad1(bh, max_w)])
        self.k_ball = jnp.stack(rows)            # (1 + num_mid + 1, max_w) f32

    def __call__(self, x, c=None):
        if self.conditional and c is None:
            raise ValueError("conditional Encoder requires c")
        B = x.shape[0]
        L = self.latent_size
        OUT = 2 * L

        # Batch tile: big tiles amortize per-grid-step overhead, but keep the
        # grid >= 2 steps for non-trivial B so "parallel" can span both
        # TensorCores on v7x.  B not divisible by TB is fine: every op is
        # row-wise and the output writeback of the last block is masked.
        if B <= 8:
            TB = B                               # block == full dim is legal
        else:
            TB = min(1024, _round_up(pl.cdiv(B, 2), 8))
        grid = (pl.cdiv(B, TB),)

        operands = [x]
        if self.conditional:
            operands.append(c)
        num_streamed = len(operands)
        operands.append(self.k_w0x)
        if self.conditional:
            operands.append(self.k_w0c)
        if self.mid_packed:
            operands.append(self.k_wmid)
        else:
            operands.extend(self.k_mid_ws)
        operands.extend([self.k_wh, self.k_ball])

        def batch_spec(a):
            return pl.BlockSpec((TB, a.shape[1]), lambda i: (i, 0),
                                memory_space=pltpu.MemorySpace.VMEM)

        def resident_spec(a):
            # Same block every grid step -> stays VMEM-resident (no re-DMA).
            nd = a.ndim
            return pl.BlockSpec(a.shape, lambda i, _nd=nd: (0,) * _nd,
                                memory_space=pltpu.MemorySpace.VMEM)

        in_specs = [batch_spec(a) for a in operands[:num_streamed]]
        in_specs += [resident_spec(a) for a in operands[num_streamed:]]

        # Un-padded (B, 2L) f32 output: last block dim == full array dim, so
        # the HBM writeback is 2L*4 bytes/row instead of a 128-lane f32 slab.
        out_specs = pl.BlockSpec((TB, OUT), lambda i: (i, 0),
                                 memory_space=pltpu.MemorySpace.VMEM)
        out_shape = jax.ShapeDtypeStruct((B, OUT), jnp.float32)

        # Cost estimate + generation-safe VMEM budget.
        mm_shapes = [self.k_w0x.shape]
        if self.conditional:
            mm_shapes.append(self.k_w0c.shape)
        if self.mid_packed:
            mm_shapes += [tuple(self.k_wmid.shape[1:])] * self.num_mid
        elif self.num_mid:
            mm_shapes += [w.shape for w in self.k_mid_ws]
        mm_shapes.append(self.k_wh.shape)
        flops = sum(2 * B * k * n for (k, n) in mm_shapes)
        bytes_accessed = (sum(int(a.size) * a.dtype.itemsize for a in operands)
                          + B * OUT * 4)
        cost = pl.CostEstimate(flops=flops, transcendentals=0,
                               bytes_accessed=int(bytes_accessed))

        resident_bytes = sum(int(a.size) * a.dtype.itemsize
                             for a in operands[num_streamed:])
        stream_bytes = 2 * TB * (x.shape[1] * 4
                                 + (c.shape[1] * 4 if self.conditional else 0)
                                 + OUT * 4)
        max_w = max(n for (_, n) in mm_shapes)
        act_bytes = 4 * TB * max_w * 4           # f32 accum + bf16 copies, margin
        # Resident operands are double-buffered by the default pipeline even
        # though their block never changes; count them twice.
        # TODO(synk): pipeline_mode=pl.Buffered(1) on the resident specs would
        # halve that — only matters for very wide hidden layers on v7x (64 MiB).
        vmem_limit = int(min(48 * 1024 * 1024,
                             max(8 * 1024 * 1024,
                                 2 * resident_bytes + stream_bytes + act_bytes
                                 + (2 << 20))))

        kernel = _make_encoder_kernel(self.num_mid, self.conditional,
                                      self.mid_packed, tuple(self.bias_widths))

        out = pl.pallas_call(
            kernel,
            grid=grid,
            in_specs=in_specs,
            out_specs=out_specs,
            out_shape=out_shape,
            compiler_params=pltpu.CompilerParams(
                dimension_semantics=("parallel",),
                vmem_limit_bytes=vmem_limit),
            cost_estimate=cost,
        )(*operands)

        means = out[:, :L]
        log_vars = out[:, L:]
        return means, log_vars


def _reference_forward(enc: Encoder, x, c):
    """Plain-JAX reference using the same bf16-matmul / f32-accumulate math."""
    def dot_bf16(a, w):
        return jnp.dot(a.astype(jnp.bfloat16), w.astype(jnp.bfloat16),
                       preferred_element_type=jnp.float32)

    if enc.conditional:
        x = jnp.concatenate([x, c], axis=-1)
    h = x
    for (w, b) in enc.mlp_params:
        h = jnp.maximum(dot_bf16(h, w) + b, 0.0)
    means = dot_bf16(h, enc.wm) + enc.bm
    log_vars = dot_bf16(h, enc.wv) + enc.bv
    return means, log_vars


if __name__ == "__main__":
    key = jax.random.PRNGKey(0)
    k_x, k_c, k_params = jax.random.split(key, 3)

    # Small shapes consistent with the module: batch=2, input=32,
    # hidden=[64, 32], latent=16, condition=8.
    batch = 2
    layer_sizes = [32, 64, 32]
    latent_size = 16
    condition_size = 8

    x = jax.random.normal(k_x, (batch, layer_sizes[0]), jnp.float32)
    c = jax.random.normal(k_c, (batch, condition_size), jnp.float32)

    enc = Encoder(list(layer_sizes), latent_size, conditional=True,
                  condition_size=condition_size, key=k_params)

    means, log_vars = enc(x, c)
    jax.block_until_ready((means, log_vars))

    ref_means, ref_log_vars = _reference_forward(enc, x, c)
    assert means.shape == (batch, latent_size)
    assert log_vars.shape == (batch, latent_size)
    assert jnp.allclose(means, ref_means, atol=2e-3, rtol=2e-3), (
        float(jnp.max(jnp.abs(means - ref_means))))
    assert jnp.allclose(log_vars, ref_log_vars, atol=2e-3, rtol=2e-3), (
        float(jnp.max(jnp.abs(log_vars - ref_log_vars))))

    print("KERNEL_OK")
</pallas_src>

<mosaic_0001>
module attributes {stable_mosaic.version = 11 : i64} {
  func.func @kernel(%arg0: i32, %arg1: memref<2x32xf32, #tpu.memory_space<vmem>>, %arg2: memref<2x8xf32, #tpu.memory_space<vmem>>, %arg3: memref<32x128xbf16, #tpu.memory_space<vmem>>, %arg4: memref<8x128xbf16, #tpu.memory_space<vmem>>, %arg5: memref<1x128x128xbf16, #tpu.memory_space<vmem>>, %arg6: memref<128x128xbf16, #tpu.memory_space<vmem>>, %arg7: memref<3x128xf32, #tpu.memory_space<vmem>>, %arg8: memref<2x32xf32, #tpu.memory_space<vmem>>) attributes {dimension_semantics = [#tpu.dimension_semantics<parallel>], iteration_bounds = array<i64: 1>, scalar_prefetch = 0 : i64, scratch_operands = 0 : i64, tpu.core_type = #tpu.core_type<tc>, window_params = [{transform_indices = @transform_0, window_bounds = array<i64: 2, 32>}, {transform_indices = @transform_1, window_bounds = array<i64: 2, 8>}, {pipeline_mode = #tpu.pipeline_mode<synchronous>, transform_indices = @transform_2, window_bounds = array<i64: 32, 128>}, {pipeline_mode = #tpu.pipeline_mode<synchronous>, transform_indices = @transform_3, window_bounds = array<i64: 8, 128>}, {pipeline_mode = #tpu.pipeline_mode<synchronous>, transform_indices = @transform_4, window_bounds = array<i64: 1, 128, 128>}, {pipeline_mode = #tpu.pipeline_mode<synchronous>, transform_indices = @transform_5, window_bounds = array<i64: 128, 128>}, {pipeline_mode = #tpu.pipeline_mode<synchronous>, transform_indices = @transform_6, window_bounds = array<i64: 3, 128>}, {transform_indices = @transform_7, window_bounds = array<i64: 2, 32>}]} {
    %c0 = arith.constant 0 : index
    %c0_0 = arith.constant 0 : index
    %0 = vector.load %arg7[%c0, %c0_0] : memref<3x128xf32, #tpu.memory_space<vmem>>, vector<3x128xf32>
    %c0_1 = arith.constant 0 : index
    %c0_2 = arith.constant 0 : index
    %1 = vector.load %arg1[%c0_1, %c0_2] : memref<2x32xf32, #tpu.memory_space<vmem>>, vector<2x32xf32>
    %2 = arith.truncf %1 : vector<2x32xf32> to vector<2x32xbf16>
    %c0_3 = arith.constant 0 : index
    %c0_4 = arith.constant 0 : index
    %3 = vector.load %arg3[%c0_3, %c0_4] : memref<32x128xbf16, #tpu.memory_space<vmem>>, vector<32x128xbf16>
    %cst = arith.constant dense<0.000000e+00> : vector<2x128xf32>
    %4 = tpu.matmul %2, %3, %cst {dimension_numbers = #tpu.dot_dimension_numbers<[1], [0], [0], [1], [0, 0, 1, 1], [], []>} : vector<2x32xbf16>, vector<32x128xbf16>, vector<2x128xf32> -> vector<2x128xf32>
    %c0_5 = arith.constant 0 : index
    %c0_6 = arith.constant 0 : index
    %5 = vector.load %arg2[%c0_5, %c0_6] : memref<2x8xf32, #tpu.memory_space<vmem>>, vector<2x8xf32>
    %6 = arith.truncf %5 : vector<2x8xf32> to vector<2x8xbf16>
    %c0_7 = arith.constant 0 : index
    %c0_8 = arith.constant 0 : index
    %7 = vector.load %arg4[%c0_7, %c0_8] : memref<8x128xbf16, #tpu.memory_space<vmem>>, vector<8x128xbf16>
    %cst_9 = arith.constant dense<0.000000e+00> : vector<2x128xf32>
    %8 = tpu.matmul %6, %7, %cst_9 {dimension_numbers = #tpu.dot_dimension_numbers<[1], [0], [0], [1], [0, 0, 1, 1], [], []>} : vector<2x8xbf16>, vector<8x128xbf16>, vector<2x128xf32> -> vector<2x128xf32>
    %9 = arith.addf %4, %8 : vector<2x128xf32>
    %10 = vector.extract_strided_slice %0 {offsets = [0, 0], sizes = [1, 128], strides = [1, 1]} : vector<3x128xf32> to vector<1x128xf32>
    %11 = vector.broadcast %10 : vector<1x128xf32> to vector<2x128xf32>
    %12 = arith.addf %9, %11 : vector<2x128xf32>
    %cst_10 = arith.constant 0.000000e+00 : f32
    %13 = vector.broadcast %cst_10 : f32 to vector<2x128xf32>
    %14 = arith.maximumf %12, %13 : vector<2x128xf32>
    %15 = arith.truncf %14 : vector<2x128xf32> to vector<2x128xbf16>
    %c0_11 = arith.constant 0 : index
    %c0_12 = arith.constant 0 : index
    %c0_13 = arith.constant 0 : index
    %16 = vector.load %arg5[%c0_11, %c0_12, %c0_13] : memref<1x128x128xbf16, #tpu.memory_space<vmem>>, vector<1x128x128xbf16>
    %17 = vector.shape_cast %16 : vector<1x128x128xbf16> to vector<128x128xbf16>
    %cst_14 = arith.constant dense<0.000000e+00> : vector<2x128xf32>
    %18 = tpu.matmul %15, %17, %cst_14 {dimension_numbers = #tpu.dot_dimension_numbers<[1], [0], [0], [1], [0, 0, 1, 1], [], []>} : vector<2x128xbf16>, vector<128x128xbf16>, vector<2x128xf32> -> vector<2x128xf32>
    %19 = vector.extract_strided_slice %0 {offsets = [1, 0], sizes = [1, 128], strides = [1, 1]} : vector<3x128xf32> to vector<1x128xf32>
    %20 = vector.broadcast %19 : vector<1x128xf32> to vector<2x128xf32>
    %21 = arith.addf %18, %20 : vector<2x128xf32>
    %cst_15 = arith.constant 0.000000e+00 : f32
    %22 = vector.broadcast %cst_15 : f32 to vector<2x128xf32>
    %23 = arith.maximumf %21, %22 : vector<2x128xf32>
    %24 = arith.truncf %23 : vector<2x128xf32> to vector<2x128xbf16>
    %c0_16 = arith.constant 0 : index
    %c0_17 = arith.constant 0 : index
    %25 = vector.load %arg6[%c0_16, %c0_17] : memref<128x128xbf16, #tpu.memory_space<vmem>>, vector<128x128xbf16>
    %cst_18 = arith.constant dense<0.000000e+00> : vector<2x128xf32>
    %26 = tpu.matmul %24, %25, %cst_18 {dimension_numbers = #tpu.dot_dimension_numbers<[1], [0], [0], [1], [0, 0, 1, 1], [], []>} : vector<2x128xbf16>, vector<128x128xbf16>, vector<2x128xf32> -> vector<2x128xf32>
    %27 = vector.extract_strided_slice %0 {offsets = [2, 0], sizes = [1, 128], strides = [1, 1]} : vector<3x128xf32> to vector<1x128xf32>
    %28 = vector.broadcast %27 : vector<1x128xf32> to vector<2x128xf32>
    %29 = arith.addf %26, %28 : vector<2x128xf32>
    %30 = vector.extract_strided_slice %29 {offsets = [0, 0], sizes = [2, 32], strides = [1, 1]} : vector<2x128xf32> to vector<2x32xf32>
    %c0_19 = arith.constant 0 : index
    %c0_20 = arith.constant 0 : index
    %31 = vector.load %arg8[%c0_19, %c0_20] : memref<2x32xf32, #tpu.memory_space<vmem>>, vector<2x32xf32>
    tpu.vector_store %arg8[%c0_19, %c0_20], %30 {strides = array<i32>} : memref<2x32xf32, #tpu.memory_space<vmem>>, vector<2x32xf32>,
    return
  }
  func.func @transform_0(%arg0: i32) -> (i32, i32) {
    %c0_i32 = arith.constant 0 : i32
    %c0_i32_0 = arith.constant 0 : i32
    return %arg0, %c0_i32 : i32, i32
  }
  func.func @transform_1(%arg0: i32) -> (i32, i32) {
    %c0_i32 = arith.constant 0 : i32
    %c0_i32_0 = arith.constant 0 : i32
    return %arg0, %c0_i32 : i32, i32
  }
  func.func @transform_2(%arg0: i32) -> (i32, i32) {
    %c0_i32 = arith.constant 0 : i32
    %c0_i32_0 = arith.constant 0 : i32
    %c0_i32_1 = arith.constant 0 : i32
    return %c0_i32, %c0_i32_0 : i32, i32
  }
  func.func @transform_3(%arg0: i32) -> (i32, i32) {
    %c0_i32 = arith.constant 0 : i32
    %c0_i32_0 = arith.constant 0 : i32
    %c0_i32_1 = arith.constant 0 : i32
    return %c0_i32, %c0_i32_0 : i32, i32
  }
  func.func @transform_4(%arg0: i32) -> (i32, i32, i32) {
    %c0_i32 = arith.constant 0 : i32
    %c0_i32_0 = arith.constant 0 : i32
    %c0_i32_1 = arith.constant 0 : i32
    %c0_i32_2 = arith.constant 0 : i32
    return %c0_i32, %c0_i32_0, %c0_i32_1 : i32, i32, i32
  }
  func.func @transform_5(%arg0: i32) -> (i32, i32) {
    %c0_i32 = arith.constant 0 : i32
    %c0_i32_0 = arith.constant 0 : i32
    %c0_i32_1 = arith.constant 0 : i32
    return %c0_i32, %c0_i32_0 : i32, i32
  }
  func.func @transform_6(%arg0: i32) -> (i32, i32) {
    %c0_i32 = arith.constant 0 : i32
    %c0_i32_0 = arith.constant 0 : i32
    %c0_i32_1 = arith.constant 0 : i32
    return %c0_i32, %c0_i32_0 : i32, i32
  }
  func.func @transform_7(%arg0: i32) -> (i32, i32) {
    %c0_i32 = arith.constant 0 : i32
    %c0_i32_0 = arith.constant 0 : i32
    return %arg0, %c0_i32 : i32, i32
  }
}

</mosaic_0001>

<llo_original>
// kernel: tpu_custom_call.1
$region0: #{tpu_custom_call.1}
  #allocation0 [shape = 'u32[]', space=smem, size = 0x4, offset = 0x4, fixed_abs, tag = 'smem constant byte address 0x4 - core index']
  #allocation1 [shape = 'u32[144,128]{1,0:T(1,128)}', space=vmem, size = 0x12000, scoped, tag = 'internal scratch']
  %s0 = inlined_call_operand.hbm [shape: f32[2,32], index: 0, kind: input, shape index: {}]
  %s1 = inlined_call_operand.vmem [shape: f32[2,8], index: 1, kind: input, shape index: {}]
  %s2 = inlined_call_operand.hbm [shape: bf16[32,128], index: 2, kind: input, shape index: {}]
  %s3 = inlined_call_operand.vmem [shape: bf16[8,128], index: 3, kind: input, shape index: {}]
  %s4 = inlined_call_operand.hbm [shape: bf16[1,128,128], index: 4, kind: input, shape index: {}]
  %s5 = inlined_call_operand.hbm [shape: bf16[128,128], index: 5, kind: input, shape index: {}]
  %s6 = inlined_call_operand.vmem [shape: f32[3,128], index: 6, kind: input, shape index: {}]
  %s7 = inlined_call_operand.hbm [shape: f32[2,32], index: 7, kind: output, shape index: {}]
  %s8 = sld [smem:[#allocation0]]
  $region54: #{tpu_custom_call.1} parent=0
    _
  %s10 = ssub.s32 1, %s8
  %s11 = scalar_select 0, %s10, %s8
  $region1: #{tpu_custom_call.1} parent=0
    #allocation2 [shape = 'u8[1024]{0}', space=vmem, size = 0x400, scoped, tag = 'input window, operand 0, single buffered']
    #allocation3 [shape = 's32[1]{0}', space=sflag, size = 0x4, scoped, tag = 'scoped memory for tpu_custom_call.1']
    #allocation4 [shape = 's32[1]{0}', space=sflag, size = 0x4, scoped, tag = 'scoped memory for tpu_custom_call.1']
    #allocation5 [shape = 'u8[8192]{0}', space=vmem, size = 0x2000, scoped, tag = 'input window, operand 2, single buffered']
    #allocation6 [shape = 's32[1]{0}', space=sflag, size = 0x4, scoped, tag = 'scoped memory for tpu_custom_call.1']
    #allocation7 [shape = 'u8[32768]{0}', space=vmem, size = 0x8000, scoped, tag = 'input window, operand 4, single buffered']
    #allocation8 [shape = 'u8[32768]{0}', space=vmem, size = 0x8000, scoped, tag = 'input window, operand 5, single buffered']
    #allocation9 [shape = 's32[1]{0}', space=sflag, size = 0x4, scoped, tag = 'scoped memory for tpu_custom_call.1']
    #allocation10 [shape = 'u8[1024]{0}', space=vmem, size = 0x400, scoped, tag = 'output window, operand 0, single buffered']
    %12 = vsyncpa [#allocation3], 0
    %13 = vsyncpa [#allocation6], 0
    %14 = vsyncpa [#allocation9], 0
    %15 = vsyncpa [#allocation4], 0
    // Predicated region
    $region2: #{tpu_custom_call.1} parent=1 // pred_check
      _
    $region3: #{tpu_custom_call.1} parent=1 // pred_check_branch
      %17 = sbr.rel (0) target = $region5
    $region4: #{tpu_custom_call.1} parent=1 // pred_region
      %s19 = ssub.s32 32, 32
      %20 = vsyncadd [#allocation3], %s19
      %s22 = sshll.u32 [#allocation2], 4
      %s23 = int_to_ptr.vmem [resolvable:$true] %s22
      %25 = dma.hbm_to_vmem [thread:$0]  %s0, 32, %s23, [#allocation3]
    $region5: #{tpu_custom_call.1} parent=1 // pred_fallthru
      _
    // Predicated region
    $region6: #{tpu_custom_call.1} parent=1 // pred_check
      _
    $region7: #{tpu_custom_call.1} parent=1 // pred_check_branch
      %27 = sbr.rel (0) target = $region9
    $region8: #{tpu_custom_call.1} parent=1 // pred_region
      _
    $region9: #{tpu_custom_call.1} parent=1 // pred_fallthru
      _
    // Predicated region
    $region10: #{tpu_custom_call.1} parent=1 // pred_check
      _
    $region11: #{tpu_custom_call.1} parent=1 // pred_check_branch
      %29 = sbr.rel (0) target = $region13
    $region12: #{tpu_custom_call.1} parent=1 // pred_region
      %s31 = ssub.s32 256, 256
      %32 = vsyncadd [#allocation6], %s31
      %s33 = sshll.u32 [#allocation5], 4
      %s34 = int_to_ptr.vmem [resolvable:$true] %s33
      %39 = dma.hbm_to_vmem [thread:$0]  %s2, 256, %s34, [#allocation6], 64, 64, 4
    $region13: #{tpu_custom_call.1} parent=1 // pred_fallthru
      _
    // Predicated region
    $region14: #{tpu_custom_call.1} parent=1 // pred_check
      _
    $region15: #{tpu_custom_call.1} parent=1 // pred_check_branch
      %41 = sbr.rel (0) target = $region17
    $region16: #{tpu_custom_call.1} parent=1 // pred_region
      _
    $region17: #{tpu_custom_call.1} parent=1 // pred_fallthru
      _
    // Predicated region
    $region18: #{tpu_custom_call.1} parent=1 // pred_check
      _
    $region19: #{tpu_custom_call.1} parent=1 // pred_check_branch
      %43 = sbr.rel (0) target = $region21
    $region20: #{tpu_custom_call.1} parent=1 // pred_region
      %s45 = ssub.s32 1024, 1024
      %46 = vsyncadd [#allocation6], %s45
      %s47 = sshll.u32 [#allocation7], 4
      %s48 = int_to_ptr.vmem [resolvable:$true] %s47
      %53 = dma.hbm_to_vmem [thread:$0]  %s4, 1024, %s48, [#allocation6], 64, 64, 4
    $region21: #{tpu_custom_call.1} parent=1 // pred_fallthru
      _
    // Predicated region
    $region22: #{tpu_custom_call.1} parent=1 // pred_check
      _
    $region23: #{tpu_custom_call.1} parent=1 // pred_check_branch
      %55 = sbr.rel (0) target = $region25
    $region24: #{tpu_custom_call.1} parent=1 // pred_region
      %s57 = ssub.s32 1024, 1024
      %58 = vsyncadd [#allocation9], %s57
      %s59 = sshll.u32 [#allocation8], 4
      %s60 = int_to_ptr.vmem [resolvable:$true] %s59
      %65 = dma.hbm_to_vmem [thread:$0]  %s5, 1024, %s60, [#allocation9], 64, 64, 4
    $region25: #{tpu_custom_call.1} parent=1 // pred_fallthru
      _
    // Predicated region
    $region26: #{tpu_custom_call.1} parent=1 // pred_check
      _
    $region27: #{tpu_custom_call.1} parent=1 // pred_check_branch
      %67 = sbr.rel (0) target = $region29
    $region28: #{tpu_custom_call.1} parent=1 // pred_region
      _
    $region29: #{tpu_custom_call.1} parent=1 // pred_fallthru
      _
    // Predicated region
    $region30: #{tpu_custom_call.1} parent=1 // pred_check
      _
    $region31: #{tpu_custom_call.1} parent=1 // pred_check_branch
      %69 = sbr.rel (0) target = $region33
    $region32: #{tpu_custom_call.1} parent=1 // pred_region
      %70 = dma.done [#allocation3], 32
    $region33: #{tpu_custom_call.1} parent=1 // pred_fallthru
      _
    // Predicated region
    $region34: #{tpu_custom_call.1} parent=1 // pred_check
      _
    $region35: #{tpu_custom_call.1} parent=1 // pred_check_branch
      %72 = sbr.rel (0) target = $region37
    $region36: #{tpu_custom_call.1} parent=1 // pred_region
      %73 = dma.done [#allocation6], 256
    $region37: #{tpu_custom_call.1} parent=1 // pred_fallthru
      _
    // Predicated region
    $region38: #{tpu_custom_call.1} parent=1 // pred_check
      _
    $region39: #{tpu_custom_call.1} parent=1 // pred_check_branch
      %75 = sbr.rel (0) target = $region41
    $region40: #{tpu_custom_call.1} parent=1 // pred_region
      %76 = dma.done [#allocation6], 1024
    $region41: #{tpu_custom_call.1} parent=1 // pred_fallthru
      _
    // Predicated region
    $region42: #{tpu_custom_call.1} parent=1 // pred_check
      _
    $region43: #{tpu_custom_call.1} parent=1 // pred_check_branch
      %78 = sbr.rel (0) target = $region45
    $region44: #{tpu_custom_call.1} parent=1 // pred_region
      %79 = dma.done [#allocation9], 1024
    $region45: #{tpu_custom_call.1} parent=1 // pred_fallthru
      _
    %v81 = vld [vmem:[%s6] sm:$0x7]
    %v82 = vld [vmem:[#allocation2] sm:$0x3]
    %v83 = vpack.c.bf16 %v82, %v82
    %v84 = vld [vmem:[#allocation5] sm:$0xf]
    %v85 = vld [vmem:[#allocation5 + $0x4] sm:$0xf]
    %v86 = vld [vmem:[#allocation5 + $0x8] sm:$0xf]
    %v87 = vld [vmem:[#allocation5 + $0xc] sm:$0xf]
    %v88 = vld [vmem:[%s1] sm:$0x3]
    %v89 = vpack.c.bf16 %v88, %v88
    %v90 = vld [vmem:[%s3] sm:$0xf]
    %vm91 = vcmask 64512
    %v93 = vsel %vm91, %v89, 0
    %vm95 = vcmask 1043456
    %v97 = vsel %vm95, %v90, 0
    %99 = vmatprep.subr.bf16.mxu0 0
    %100 = vmatpush1.bf16.msra.mxu0 %v97
    %101 = vmatprep.subr.bf16.mxu0 0
    %102 = vmatpush1.bf16.msra.mxu0 0
    %103 = vmatprep.subr.bf16.mxu0 0
    %104 = vmatpush1.bf16.msra.mxu0 0
    %105 = vmatprep.subr.bf16.mxu0 0
    %106 = vmatpush1.bf16.msra.mxu0 0
    %107 = vmatprep.subr.bf16.mxu0 0
    %108 = vmatpush1.bf16.msra.mxu0 0
    %109 = vmatprep.subr.bf16.mxu0 0
    %110 = vmatpush1.bf16.msra.mxu0 0
    %111 = vmatprep.subr.bf16.mxu0 0
    %112 = vmatpush1.bf16.msra.mxu0 0
    %113 = vmatprep.subr.bf16.mxu0 0
    %114 = vmatpush1.bf16.msra.mxu0 0
    %115 = vmatprep.subr.bf16.mxu0 0
    %116 = vmatpush1.bf16.msra.mxu0 0
    %117 = vmatprep.subr.bf16.mxu0 0
    %118 = vmatpush1.bf16.msra.mxu0 0
    %119 = vmatprep.subr.bf16.mxu0 0
    %120 = vmatpush1.bf16.msra.mxu0 0
    %121 = vmatprep.subr.bf16.mxu0 0
    %122 = vmatpush1.bf16.msra.mxu0 0
    %123 = vmatprep.subr.bf16.mxu0 0
    %124 = vmatpush1.bf16.msra.mxu0 0
    %125 = vmatprep.subr.bf16.mxu0 0
    %126 = vmatpush1.bf16.msra.mxu0 0
    %127 = vmatprep.subr.bf16.mxu0 0
    %128 = vmatpush1.bf16.msra.mxu0 0
    %129 = vmatprep.subr.bf16.mxu0 0
    %130 = vmatpush1.bf16.msra.mxu0 0
    %131 = vmatprep.mubr.bf16.mxu0 0
    %132 = vmatmul.mubr.bf16.gmra.mrb[0].mxu0 %v93
    %v133 = vpop.f32.mrb[0].mxu0
    %v134 = vadd.f32 0.0, %v133
    %v135 = vpop.f32.mrb[0].mxu0
    %v136 = vpop.f32.mrb[0].mxu0
    %v137 = vpop.f32.mrb[0].mxu0
    %138 = vdwg.mxu0
    %v143 = vunpack.c.l.b16 %v84
    %v144 = vunpack.c.l.b16 %v85
    %v145 = vunpack.c.l.b16 %v86
    %v146 = vunpack.c.l.b16 %v87
    %v147 = vpack.c.b16 %v144, %v143
    %v148 = vpack.c.b16 %v146, %v145
    %vm151 = vcmask 261120
    %v153 = vsel %vm151, %v83, 0
    %155 = vmatprep.subr.bf16.mxu0 0
    %156 = vmatpush1.bf16.msra.mxu0 %v147
    %157 = vmatprep.subr.bf16.mxu0 0
    %158 = vmatpush1.bf16.msra.mxu0 %v148
    %159 = vmatprep.subr.bf16.mxu0 0
    %160 = vmatpush1.bf16.msra.mxu0 0
    %161 = vmatprep.subr.bf16.mxu0 0
    %162 = vmatpush1.bf16.msra.mxu0 0
    %163 = vmatprep.subr.bf16.mxu0 0
    %164 = vmatpush1.bf16.msra.mxu0 0
    %165 = vmatprep.subr.bf16.mxu0 0
    %166 = vmatpush1.bf16.msra.mxu0 0
    %167 = vmatprep.subr.bf16.mxu0 0
    %168 = vmatpush1.bf16.msra.mxu0 0
    %169 = vmatprep.subr.bf16.mxu0 0
    %170 = vmatpush1.bf16.msra.mxu0 0
    %171 = vmatprep.subr.bf16.mxu0 0
    %172 = vmatpush1.bf16.msra.mxu0 0
    %173 = vmatprep.subr.bf16.mxu0 0
    %174 = vmatpush1.bf16.msra.mxu0 0
    %175 = vmatprep.subr.bf16.mxu0 0
    %176 = vmatpush1.bf16.msra.mxu0 0
    %177 = vmatprep.subr.bf16.mxu0 0
    %178 = vmatpush1.bf16.msra.mxu0 0
    %179 = vmatprep.subr.bf16.mxu0 0
    %180 = vmatpush1.bf16.msra.mxu0 0
    %181 = vmatprep.subr.bf16.mxu0 0
    %182 = vmatpush1.bf16.msra.mxu0 0
    %183 = vmatprep.subr.bf16.mxu0 0
    %184 = vmatpush1.bf16.msra.mxu0 0
    %185 = vmatprep.subr.bf16.mxu0 0
    %186 = vmatpush1.bf16.msra.mxu0 0
    %187 = vmatprep.mubr.bf16.mxu0 0
    %188 = vmatmul.mubr.bf16.gmra.mrb[0].mxu0 %v153
    %v189 = vpop.f32.mrb[0].mxu0
    %v190 = vadd.f32 %v134, %v189
    %v191 = vpop.f32.mrb[0].mxu0
    %v192 = vpop.f32.mrb[0].mxu0
    %v193 = vpop.f32.mrb[0].mxu0
    %194 = vdwg.mxu0
    %v195 = vlaneseq
    %v196 = vshrl.u32 %v195, 7
    %v197 = vsub.s32 0, %v196
    %v198 = vrot.slane %v81, %v197
    %v199 = vadd.f32 %v190, %v198
    %v200 = vmax.f32 %v199, 0.0
    %v201 = vpack.c.bf16 %v200, %v200
    %v202 = vld [vmem:[#allocation7] sm:$0xf]
    %v203 = vld [vmem:[#allocation7 + $0x4] sm:$0xf]
    %v204 = vld [vmem:[#allocation7 + $0x8] sm:$0xf]
    %v205 = vld [vmem:[#allocation7 + $0xc] sm:$0xf]
    %v206 = vld [vmem:[#allocation7 + $0x10] sm:$0xf]
    %v207 = vld [vmem:[#allocation7 + $0x14] sm:$0xf]
    %v208 = vld [vmem:[#allocation7 + $0x18] sm:$0xf]
    %v209 = vld [vmem:[#allocation7 + $0x1c] sm:$0xf]
    %v210 = vld [vmem:[#allocation7 + $0x20] sm:$0xf]
    %v211 = vld [vmem:[#allocation7 + $0x24] sm:$0xf]
    %v212 = vld [vmem:[#allocation7 + $0x28] sm:$0xf]
    %v213 = vld [vmem:[#allocation7 + $0x2c] sm:$0xf]
    %v214 = vld [vmem:[#allocation7 + $0x30] sm:$0xf]
    %v215 = vld [vmem:[#allocation7 + $0x34] sm:$0xf]
    %v216 = vld [vmem:[#allocation7 + $0x38] sm:$0xf]
    %v217 = vld [vmem:[#allocation7 + $0x3c] sm:$0xf]
    %v218 = vlaneseq
    %v219 = vshrl.u32 %v218, 7
    %v220 = vsub.s32 1, %v219
    %v221 = vrot.slane %v81, %v220
    %v238 = vunpack.c.l.b16 %v202
    %v239 = vunpack.c.l.b16 %v203
    %v240 = vunpack.c.l.b16 %v204
    %v241 = vunpack.c.l.b16 %v205
    %v242 = vunpack.c.l.b16 %v206
    %v243 = vunpack.c.l.b16 %v207
    %v244 = vunpack.c.l.b16 %v208
    %v245 = vunpack.c.l.b16 %v209
    %v246 = vunpack.c.l.b16 %v210
    %v247 = vunpack.c.l.b16 %v211
    %v248 = vunpack.c.l.b16 %v212
    %v249 = vunpack.c.l.b16 %v213
    %v250 = vunpack.c.l.b16 %v214
    %v251 = vunpack.c.l.b16 %v215
    %v252 = vunpack.c.l.b16 %v216
    %v253 = vunpack.c.l.b16 %v217
    %v254 = vpack.c.b16 %v239, %v238
    %v255 = vpack.c.b16 %v241, %v240
    %v256 = vpack.c.b16 %v243, %v242
    %v257 = vpack.c.b16 %v245, %v244
    %v258 = vpack.c.b16 %v247, %v246
    %v259 = vpack.c.b16 %v249, %v248
    %v260 = vpack.c.b16 %v251, %v250
    %v261 = vpack.c.b16 %v253, %v252
    %270 = vmatprep.subr.bf16.mxu0 0
    %271 = vmatpush1.bf16.msra.mxu0 %v254
    %272 = vmatprep.subr.bf16.mxu0 0
    %273 = vmatpush1.bf16.msra.mxu0 %v255
    %274 = vmatprep.subr.bf16.mxu0 0
    %275 = vmatpush1.bf16.msra.mxu0 %v256
    %276 = vmatprep.subr.bf16.mxu0 0
    %277 = vmatpush1.bf16.msra.mxu0 %v257
    %278 = vmatprep.subr.bf16.mxu0 0
    %279 = vmatpush1.bf16.msra.mxu0 %v258
    %280 = vmatprep.subr.bf16.mxu0 0
    %281 = vmatpush1.bf16.msra.mxu0 %v259
    %282 = vmatprep.subr.bf16.mxu0 0
    %283 = vmatpush1.bf16.msra.mxu0 %v260
    %284 = vmatprep.subr.bf16.mxu0 0
    %285 = vmatpush1.bf16.msra.mxu0 %v261
    %286 = vmatprep.subr.bf16.mxu0 0
    %287 = vmatpush1.bf16.msra.mxu0 0
    %288 = vmatprep.subr.bf16.mxu0 0
    %289 = vmatpush1.bf16.msra.mxu0 0
    %290 = vmatprep.subr.bf16.mxu0 0
    %291 = vmatpush1.bf16.msra.mxu0 0
    %292 = vmatprep.subr.bf16.mxu0 0
    %293 = vmatpush1.bf16.msra.mxu0 0
    %294 = vmatprep.subr.bf16.mxu0 0
    %295 = vmatpush1.bf16.msra.mxu0 0
    %296 = vmatprep.subr.bf16.mxu0 0
    %297 = vmatpush1.bf16.msra.mxu0 0
    %298 = vmatprep.subr.bf16.mxu0 0
    %299 = vmatpush1.bf16.msra.mxu0 0
    %300 = vmatprep.subr.bf16.mxu0 0
    %301 = vmatpush1.bf16.msra.mxu0 0
    %302 = vmatprep.mubr.bf16.mxu0 0
    %303 = vmatmul.mubr.bf16.gmra.mrb[0].mxu0 %v201
    %v304 = vpop.f32.mrb[0].mxu0
    %v305 = vadd.f32 %v221, %v304
    %v306 = vpop.f32.mrb[0].mxu0
    %v307 = vpop.f32.mrb[0].mxu0
    %v308 = vpop.f32.mrb[0].mxu0
    %309 = vdwg.mxu0
    %v310 = vmax.f32 %v305, 0.0
    %v311 = vpack.c.bf16 %v310, %v310
    %v312 = vld [vmem:[#allocation8] sm:$0xf]
    %v313 = vld [vmem:[#allocation8 + $0x4] sm:$0xf]
    %v314 = vld [vmem:[#allocation8 + $0x8] sm:$0xf]
    %v315 = vld [vmem:[#allocation8 + $0xc] sm:$0xf]
    %v316 = vld [vmem:[#allocation8 + $0x10] sm:$0xf]
    %v317 = vld [vmem:[#allocation8 + $0x14] sm:$0xf]
    %v318 = vld [vmem:[#allocation8 + $0x18] sm:$0xf]
    %v319 = vld [vmem:[#allocation8 + $0x1c] sm:$0xf]
    %v320 = vld [vmem:[#allocation8 + $0x20] sm:$0xf]
    %v321 = vld [vmem:[#allocation8 + $0x24] sm:$0xf]
    %v322 = vld [vmem:[#allocation8 + $0x28] sm:$0xf]
    %v323 = vld [vmem:[#allocation8 + $0x2c] sm:$0xf]
    %v324 = vld [vmem:[#allocation8 + $0x30] sm:$0xf]
    %v325 = vld [vmem:[#allocation8 + $0x34] sm:$0xf]
    %v326 = vld [vmem:[#allocation8 + $0x38] sm:$0xf]
    %v327 = vld [vmem:[#allocation8 + $0x3c] sm:$0xf]
    %v328 = vlaneseq
    %v329 = vshrl.u32 %v328, 7
    %v330 = vsub.s32 2, %v329
    %v331 = vrot.slane %v81, %v330
    %v348 = vunpack.c.l.b16 %v312
    %v349 = vunpack.c.l.b16 %v313
    %v350 = vunpack.c.l.b16 %v314
    %v351 = vunpack.c.l.b16 %v315
    %v352 = vunpack.c.l.b16 %v316
    %v353 = vunpack.c.l.b16 %v317
    %v354 = vunpack.c.l.b16 %v318
    %v355 = vunpack.c.l.b16 %v319
    %v356 = vunpack.c.l.b16 %v320
    %v357 = vunpack.c.l.b16 %v321
    %v358 = vunpack.c.l.b16 %v322
    %v359 = vunpack.c.l.b16 %v323
    %v360 = vunpack.c.l.b16 %v324
    %v361 = vunpack.c.l.b16 %v325
    %v362 = vunpack.c.l.b16 %v326
    %v363 = vunpack.c.l.b16 %v327
    %v364 = vpack.c.b16 %v349, %v348
    %v365 = vpack.c.b16 %v351, %v350
    %v366 = vpack.c.b16 %v353, %v352
    %v367 = vpack.c.b16 %v355, %v354
    %v368 = vpack.c.b16 %v357, %v356
    %v369 = vpack.c.b16 %v359, %v358
    %v370 = vpack.c.b16 %v361, %v360
    %v371 = vpack.c.b16 %v363, %v362
    %380 = vmatprep.subr.bf16.mxu0 0
    %381 = vmatpush1.bf16.msra.mxu0 %v364
    %382 = vmatprep.subr.bf16.mxu0 0
    %383 = vmatpush1.bf16.msra.mxu0 %v365
    %384 = vmatprep.subr.bf16.mxu0 0
    %385 = vmatpush1.bf16.msra.mxu0 %v366
    %386 = vmatprep.subr.bf16.mxu0 0
    %387 = vmatpush1.bf16.msra.mxu0 %v367
    %388 = vmatprep.subr.bf16.mxu0 0
    %389 = vmatpush1.bf16.msra.mxu0 %v368
    %390 = vmatprep.subr.bf16.mxu0 0
    %391 = vmatpush1.bf16.msra.mxu0 %v369
    %392 = vmatprep.subr.bf16.mxu0 0
    %393 = vmatpush1.bf16.msra.mxu0 %v370
    %394 = vmatprep.subr.bf16.mxu0 0
    %395 = vmatpush1.bf16.msra.mxu0 %v371
    %396 = vmatprep.subr.bf16.mxu0 0
    %397 = vmatpush1.bf16.msra.mxu0 0
    %398 = vmatprep.subr.bf16.mxu0 0
    %399 = vmatpush1.bf16.msra.mxu0 0
    %400 = vmatprep.subr.bf16.mxu0 0
    %401 = vmatpush1.bf16.msra.mxu0 0
    %402 = vmatprep.subr.bf16.mxu0 0
    %403 = vmatpush1.bf16.msra.mxu0 0
    %404 = vmatprep.subr.bf16.mxu0 0
    %405 = vmatpush1.bf16.msra.mxu0 0
    %406 = vmatprep.subr.bf16.mxu0 0
    %407 = vmatpush1.bf16.msra.mxu0 0
    %408 = vmatprep.subr.bf16.mxu0 0
    %409 = vmatpush1.bf16.msra.mxu0 0
    %410 = vmatprep.subr.bf16.mxu0 0
    %411 = vmatpush1.bf16.msra.mxu0 0
    %412 = vmatprep.mubr.bf16.mxu0 0
    %413 = vmatmul.mubr.bf16.gmra.mrb[0].mxu0 %v311
    %v414 = vpop.f32.mrb[0].mxu0
    %v415 = vadd.f32 %v331, %v414
    %v416 = vpop.f32.mrb[0].mxu0
    %v417 = vpop.f32.mrb[0].mxu0
    %v418 = vpop.f32.mrb[0].mxu0
    %419 = vdwg.mxu0
    %vm420 = vcmask 254976
    %421 = vst.msk [vmem:[#allocation10] sm:$0x3] %vm420, %v415
    // Predicated region
    $region46: #{tpu_custom_call.1} parent=1 // pred_check
      _
    $region47: #{tpu_custom_call.1} parent=1 // pred_check_branch
      %423 = sbr.rel (0) target = $region49
    $region48: #{tpu_custom_call.1} parent=1 // pred_region
      %s425 = ssub.s32 32, 32
      %426 = vsyncadd [#allocation4], %s425
      %s428 = sshll.u32 [#allocation10], 4
      %s429 = int_to_ptr.vmem [resolvable:$true] %s428
      %431 = dma.vmem_to_hbm [thread:$0]  %s429, 32, %s7, [#allocation4]
    $region49: #{tpu_custom_call.1} parent=1 // pred_fallthru
      _
    // Predicated region
    $region50: #{tpu_custom_call.1} parent=1 // pred_check
      _
    $region51: #{tpu_custom_call.1} parent=1 // pred_check_branch
      %433 = sbr.rel (0) target = $region53
    $region52: #{tpu_custom_call.1} parent=1 // pred_region
      %434 = dma.done [#allocation4], 32
    $region53: #{tpu_custom_call.1} parent=1 // pred_fallthru
      _
    %435 = vsyncpa [#allocation3], 1
    %436 = vsyncpa [#allocation6], 1
    %437 = vsyncpa [#allocation9], 1
    %438 = vsyncpa [#allocation4], 1

</llo_original>
